<compile_context>
chip_gen: v7x
topology: tpu7x:2x2x1
jax: 0.10.0
libtpu: 0.0.40
codegen_flags: <defaults>
</compile_context>

<pallas_src>
import jax
import jax.numpy as jnp
from jax.experimental import pallas as pl
from jax.experimental.pallas import tpu as pltpu


def _round_up(x, m):
    return ((x + m - 1) // m) * m


# --------------------------------------------------------------------------
# Kernel 1: unnormalized logits + online log-sum-exp (single pass over W).
# --------------------------------------------------------------------------
def _logits_lse_kernel(x_ref, w_ref, b_ref, logits_ref, lse_ref, m_sc, l_sc):
    # x_ref: (TM, E) bf16, w_ref: (E, TV) bf16, b_ref: (1, TV) f32
    # logits_ref: (TM, TV) out-dtype, lse_ref: (TM, 1) f32
    # m_sc / l_sc: (TM, 1) f32 VMEM scratch (persist across the vocab axis).
    j = pl.program_id(1)

    @pl.when(j == 0)
    def _init():
        m_sc[...] = jnp.full_like(m_sc, -jnp.inf)
        l_sc[...] = jnp.zeros_like(l_sc)

    logits = jnp.dot(x_ref[...], w_ref[...], preferred_element_type=jnp.float32)
    logits = logits + b_ref[...]                      # (TM, TV) f32
    logits_ref[...] = logits.astype(logits_ref.dtype)  # store unnormalized tile

    # Online max / sum-exp accumulation (f32).
    m_prev = m_sc[...]
    m_new = jnp.maximum(m_prev, jnp.max(logits, axis=-1, keepdims=True))
    l_sc[...] = (l_sc[...] * jnp.exp(m_prev - m_new)
                 + jnp.sum(jnp.exp(logits - m_new), axis=-1, keepdims=True))
    m_sc[...] = m_new

    @pl.when(j == pl.num_programs(1) - 1)
    def _finalize():
        lse_ref[...] = m_sc[...] + jnp.log(l_sc[...])


# --------------------------------------------------------------------------
# Kernel 2: out = logits - lse  (elementwise, in-place on the logits buffer).
# --------------------------------------------------------------------------
def _normalize_kernel(logits_ref, lse_ref, o_ref):
    o_ref[...] = (logits_ref[...].astype(jnp.float32)
                  - lse_ref[...]).astype(o_ref.dtype)


# --------------------------------------------------------------------------
# One-time parameter preparation (do NOT call per forward step).
# --------------------------------------------------------------------------
def prepare_generator_params(weight, bias, *, tile_vocab=1024,
                             compute_dtype=jnp.bfloat16):
    """weight: (V, E) — PyTorch nn.Linear layout.  bias: (V,).

    Returns a dict with the transposed / cast / lane-padded weight (E, V_pad),
    the padded f32 bias (1, V_pad) (-1e30 in padded columns), the true V and
    the vocab tile size.  All conversion cost is paid once here.
    """
    V, E = weight.shape
    tv = min(tile_vocab, _round_up(V, 128))
    v_pad = _round_up(V, tv)

    w = weight.T.astype(compute_dtype)                     # (E, V) bf16
    b = bias.astype(jnp.float32).reshape(1, V)
    if v_pad != V:
        w = jnp.pad(w, ((0, 0), (0, v_pad - V)))
        # Very negative (finite) bias => padded columns contribute ~0 to lse.
        b = jnp.pad(b, ((0, 0), (0, v_pad - V)), constant_values=-1e30)

    w = jax.block_until_ready(w)
    b = jax.block_until_ready(b)
    return {"w": w, "b": b, "V": V, "tv": tv}


# --------------------------------------------------------------------------
# Forward pass.
# --------------------------------------------------------------------------
def generator_forward(x, params, *, tile_rows=512, out_dtype=None,
                      compute_dtype=jnp.bfloat16):
    """x: (B, S, E).  Returns (B, S, V) log-probabilities."""
    w, b2d, V, tv = params["w"], params["b"], params["V"], params["tv"]
    B, S, E = x.shape
    Ew, v_pad = w.shape
    assert Ew == E, "prepared weight must be (embedding_dim, padded_vocab)"
    M = B * S
    out_dtype = x.dtype if out_dtype is None else out_dtype

    # Row tile: MXU-friendly, clamped for small M; keep >= 2 row tiles when M
    # allows it so the "parallel" row axis can feed both TensorCores (v7x).
    tm = min(tile_rows, _round_up(M, 8))
    while tm > 256 and -(-M // tm) < 2:
        tm = _round_up(max(tm // 2, 8), 8)
    m_pad = _round_up(M, tm)

    # NOTE: ideally x arrives already in bf16 from the layer upstream; this
    # cast is a cheap M*E pass compared with the W / output traffic.
    x2d = x.reshape(M, E).astype(compute_dtype)
    if m_pad != M:
        x2d = jnp.pad(x2d, ((0, m_pad - M), (0, 0)))

    grid = (m_pad // tm, v_pad // tv)

    # ---- Pass 1: logits + per-row log-sum-exp (W streamed once). ----------
    logits2d, lse2d = pl.pallas_call(
        _logits_lse_kernel,
        out_shape=(jax.ShapeDtypeStruct((m_pad, v_pad), out_dtype),
                   jax.ShapeDtypeStruct((m_pad, 1), jnp.float32)),
        grid_spec=pltpu.PrefetchScalarGridSpec(
            num_scalar_prefetch=0,
            grid=grid,
            in_specs=[
                # x row tile: constant across the vocab axis (fetched once per i).
                pl.BlockSpec((tm, E), lambda i, j: (i, 0)),
                # weight vocab tile: streamed over j.  (pipeline_mode=
                # pl.Buffered(3) is a possible sweep knob here.)
                pl.BlockSpec((E, tv), lambda i, j: (0, j)),
                # bias vocab tile.
                pl.BlockSpec((1, tv), lambda i, j: (0, j)),
            ],
            out_specs=[
                pl.BlockSpec((tm, tv), lambda i, j: (i, j)),   # logits
                pl.BlockSpec((tm, 1), lambda i, j: (i, 0)),    # lse (written at last j)
            ],
            scratch_shapes=[
                pltpu.VMEM((tm, 1), jnp.float32),   # running max m
                pltpu.VMEM((tm, 1), jnp.float32),   # running sum-exp l
            ],
        ),
        compiler_params=pltpu.CompilerParams(
            dimension_semantics=("parallel", "arbitrary"),
            vmem_limit_bytes=64 * 1024 * 1024,
        ),
    )(x2d, w, b2d)

    # ---- Pass 2: subtract lse, in place on the logits buffer. -------------
    out2d = pl.pallas_call(
        _normalize_kernel,
        out_shape=jax.ShapeDtypeStruct((m_pad, v_pad), out_dtype),
        grid_spec=pltpu.PrefetchScalarGridSpec(
            num_scalar_prefetch=0,
            grid=grid,
            in_specs=[
                pl.BlockSpec((tm, tv), lambda i, j: (i, j)),
                pl.BlockSpec((tm, 1), lambda i, j: (i, 0)),
            ],
            out_specs=pl.BlockSpec((tm, tv), lambda i, j: (i, j)),
        ),
        input_output_aliases={0: 0},   # reuse the logits HBM buffer for the output
        compiler_params=pltpu.CompilerParams(
            dimension_semantics=("parallel", "parallel"),
        ),
    )(logits2d, lse2d)

    return out2d[:M, :V].reshape(B, S, V)


# --------------------------------------------------------------------------
# Reference (matches the kernel's bf16-input / f32-accumulate numerics).
# --------------------------------------------------------------------------
def _reference(x, weight, bias, compute_dtype=jnp.bfloat16):
    xr = x.astype(compute_dtype).astype(jnp.float32)
    wr = weight.astype(compute_dtype).astype(jnp.float32)   # (V, E)
    logits = xr.reshape(-1, x.shape[-1]) @ wr.T + bias.astype(jnp.float32)
    out = jax.nn.log_softmax(logits, axis=-1)
    return out.reshape(x.shape[0], x.shape[1], weight.shape[0])


if __name__ == "__main__":
    key = jax.random.PRNGKey(0)

    # --- Case 1: small, tile-aligned shapes ---------------------------------
    batch, seq, embedding_dim, tgt_vocab_size = 2, 8, 32, 128
    kx, kw, kb, k2x, k2w, k2b = jax.random.split(key, 6)

    x = jax.random.normal(kx, (batch, seq, embedding_dim), dtype=jnp.float32)
    # PyTorch nn.Linear stores weight as (V, E); prepare() transposes once.
    weight = jax.random.normal(kw, (tgt_vocab_size, embedding_dim),
                               dtype=jnp.float32) * 0.05
    bias = jax.random.normal(kb, (tgt_vocab_size,), dtype=jnp.float32) * 0.05

    params = prepare_generator_params(weight, bias)
    out = jax.block_until_ready(generator_forward(x, params))
    ref = _reference(x, weight, bias)
    assert out.shape == (batch, seq, tgt_vocab_size)
    assert jnp.allclose(out, ref, atol=1e-3, rtol=1e-3), \
        float(jnp.max(jnp.abs(out - ref)))

    # bf16-output smoke path (halves output store traffic).
    out_bf16 = jax.block_until_ready(
        generator_forward(x, params, out_dtype=jnp.bfloat16))
    assert out_bf16.dtype == jnp.bfloat16
    assert jnp.allclose(out_bf16.astype(jnp.float32), ref, atol=5e-2, rtol=5e-2)

    # --- Case 2: shapes NOT divisible by the tiles (exercises padding path) --
    b2, s2, e2, v2 = 2, 5, 32, 100
    x2 = jax.random.normal(k2x, (b2, s2, e2), dtype=jnp.float32)
    w2 = jax.random.normal(k2w, (v2, e2), dtype=jnp.float32) * 0.05
    bi2 = jax.random.normal(k2b, (v2,), dtype=jnp.float32) * 0.05

    params2 = prepare_generator_params(w2, bi2)
    out2 = jax.block_until_ready(generator_forward(x2, params2))
    ref2 = _reference(x2, w2, bi2)
    assert out2.shape == (b2, s2, v2)
    assert jnp.allclose(out2, ref2, atol=1e-3, rtol=1e-3), \
        float(jnp.max(jnp.abs(out2 - ref2)))

    print("KERNEL_OK")
</pallas_src>

<mosaic_0001>
module attributes {stable_mosaic.version = 11 : i64} {
  func.func @_logits_lse_kernel(%arg0: i32, %arg1: i32, %arg2: memref<16x32xbf16, #tpu.memory_space<vmem>>, %arg3: memref<32x128xbf16, #tpu.memory_space<vmem>>, %arg4: memref<1x128xf32, #tpu.memory_space<vmem>>, %arg5: memref<16x128xf32, #tpu.memory_space<vmem>>, %arg6: memref<16x1xf32, #tpu.memory_space<vmem>>, %arg7: memref<16x1xf32, #tpu.memory_space<vmem>>, %arg8: memref<16x1xf32, #tpu.memory_space<vmem>>) attributes {dimension_semantics = [#tpu.dimension_semantics<parallel>, #tpu.dimension_semantics<arbitrary>], iteration_bounds = array<i64: 1, 1>, scalar_prefetch = 0 : i64, scratch_operands = 2 : i64, tpu.core_type = #tpu.core_type<tc>, window_params = [{transform_indices = @transform_0, window_bounds = array<i64: 16, 32>}, {transform_indices = @transform_1, window_bounds = array<i64: 32, 128>}, {transform_indices = @transform_2, window_bounds = array<i64: 1, 128>}, {transform_indices = @transform_3, window_bounds = array<i64: 16, 128>}, {transform_indices = @transform_4, window_bounds = array<i64: 16, 1>}]} {
    %c0_i32 = arith.constant 0 : i32
    %0 = arith.cmpi eq, %arg1, %c0_i32 : i32
    %1 = arith.extui %0 : i1 to i32
    %c0_i32_0 = arith.constant 0 : i32
    %2 = arith.cmpi ne, %1, %c0_i32_0 : i32
    scf.if %2 {
      %cst_20 = arith.constant 0xFF800000 : f32
      %29 = vector.broadcast %cst_20 : f32 to vector<16x1xf32>
      %c0_21 = arith.constant 0 : index
      %c0_22 = arith.constant 0 : index
      %30 = vector.load %arg7[%c0_21, %c0_22] : memref<16x1xf32, #tpu.memory_space<vmem>>, vector<16x1xf32>
      tpu.vector_store %arg7[%c0_21, %c0_22], %29 {strides = array<i32>} : memref<16x1xf32, #tpu.memory_space<vmem>>, vector<16x1xf32>,
      %cst_23 = arith.constant 0.000000e+00 : f32
      %31 = vector.broadcast %cst_23 : f32 to vector<16x1xf32>
      %c0_24 = arith.constant 0 : index
      %c0_25 = arith.constant 0 : index
      %32 = vector.load %arg8[%c0_24, %c0_25] : memref<16x1xf32, #tpu.memory_space<vmem>>, vector<16x1xf32>
      tpu.vector_store %arg8[%c0_24, %c0_25], %31 {strides = array<i32>} : memref<16x1xf32, #tpu.memory_space<vmem>>, vector<16x1xf32>,
    } else {
    }
    %c0 = arith.constant 0 : index
    %c0_1 = arith.constant 0 : index
    %3 = vector.load %arg2[%c0, %c0_1] : memref<16x32xbf16, #tpu.memory_space<vmem>>, vector<16x32xbf16>
    %c0_2 = arith.constant 0 : index
    %c0_3 = arith.constant 0 : index
    %4 = vector.load %arg3[%c0_2, %c0_3] : memref<32x128xbf16, #tpu.memory_space<vmem>>, vector<32x128xbf16>
    %cst = arith.constant dense<0.000000e+00> : vector<16x128xf32>
    %5 = tpu.matmul %3, %4, %cst {dimension_numbers = #tpu.dot_dimension_numbers<[1], [0], [0], [1], [0, 0, 1, 1], [], []>} : vector<16x32xbf16>, vector<32x128xbf16>, vector<16x128xf32> -> vector<16x128xf32>
    %c0_4 = arith.constant 0 : index
    %c0_5 = arith.constant 0 : index
    %6 = vector.load %arg4[%c0_4, %c0_5] : memref<1x128xf32, #tpu.memory_space<vmem>>, vector<1x128xf32>
    %7 = vector.broadcast %6 : vector<1x128xf32> to vector<16x128xf32>
    %8 = arith.addf %5, %7 : vector<16x128xf32>
    %c0_6 = arith.constant 0 : index
    %c0_7 = arith.constant 0 : index
    %9 = vector.load %arg5[%c0_6, %c0_7] : memref<16x128xf32, #tpu.memory_space<vmem>>, vector<16x128xf32>
    tpu.vector_store %arg5[%c0_6, %c0_7], %8 {strides = array<i32>} : memref<16x128xf32, #tpu.memory_space<vmem>>, vector<16x128xf32>,
    %c0_8 = arith.constant 0 : index
    %c0_9 = arith.constant 0 : index
    %10 = vector.load %arg7[%c0_8, %c0_9] : memref<16x1xf32, #tpu.memory_space<vmem>>, vector<16x1xf32>
    %cst_10 = arith.constant dense<0xFF800000> : vector<16xf32>
    %11 = vector.multi_reduction <maximumf>, %8, %cst_10 [1] : vector<16x128xf32> to vector<16xf32>
    %12 = vector.shape_cast %11 : vector<16xf32> to vector<16x1xf32>
    %13 = arith.maximumf %10, %12 : vector<16x1xf32>
    %c0_11 = arith.constant 0 : index
    %c0_12 = arith.constant 0 : index
    %14 = vector.load %arg8[%c0_11, %c0_12] : memref<16x1xf32, #tpu.memory_space<vmem>>, vector<16x1xf32>
    %15 = arith.subf %10, %13 : vector<16x1xf32>
    %16 = math.exp %15 : vector<16x1xf32>
    %17 = arith.mulf %14, %16 : vector<16x1xf32>
    %18 = vector.broadcast %13 : vector<16x1xf32> to vector<16x128xf32>
    %19 = arith.subf %8, %18 : vector<16x128xf32>
    %20 = math.exp %19 : vector<16x128xf32>
    %cst_13 = arith.constant dense<0.000000e+00> : vector<16xf32>
    %21 = vector.multi_reduction <add>, %20, %cst_13 [1] : vector<16x128xf32> to vector<16xf32>
    %22 = vector.shape_cast %21 : vector<16xf32> to vector<16x1xf32>
    %23 = arith.addf %17, %22 : vector<16x1xf32>
    %c0_14 = arith.constant 0 : index
    %c0_15 = arith.constant 0 : index
    %24 = vector.load %arg8[%c0_14, %c0_15] : memref<16x1xf32, #tpu.memory_space<vmem>>, vector<16x1xf32>
    tpu.vector_store %arg8[%c0_14, %c0_15], %23 {strides = array<i32>} : memref<16x1xf32, #tpu.memory_space<vmem>>, vector<16x1xf32>,
    %c0_16 = arith.constant 0 : index
    %c0_17 = arith.constant 0 : index
    %25 = vector.load %arg7[%c0_16, %c0_17] : memref<16x1xf32, #tpu.memory_space<vmem>>, vector<16x1xf32>
    tpu.vector_store %arg7[%c0_16, %c0_17], %13 {strides = array<i32>} : memref<16x1xf32, #tpu.memory_space<vmem>>, vector<16x1xf32>,
    %c0_i32_18 = arith.constant 0 : i32
    %26 = arith.cmpi eq, %arg1, %c0_i32_18 : i32
    %27 = arith.extui %26 : i1 to i32
    %c0_i32_19 = arith.constant 0 : i32
    %28 = arith.cmpi ne, %27, %c0_i32_19 : i32
    scf.if %28 {
      %c0_20 = arith.constant 0 : index
      %c0_21 = arith.constant 0 : index
      %29 = vector.load %arg7[%c0_20, %c0_21] : memref<16x1xf32, #tpu.memory_space<vmem>>, vector<16x1xf32>
      %c0_22 = arith.constant 0 : index
      %c0_23 = arith.constant 0 : index
      %30 = vector.load %arg8[%c0_22, %c0_23] : memref<16x1xf32, #tpu.memory_space<vmem>>, vector<16x1xf32>
      %31 = math.log %30 : vector<16x1xf32>
      %32 = arith.addf %29, %31 : vector<16x1xf32>
      %c0_24 = arith.constant 0 : index
      %c0_25 = arith.constant 0 : index
      %33 = vector.load %arg6[%c0_24, %c0_25] : memref<16x1xf32, #tpu.memory_space<vmem>>, vector<16x1xf32>
      tpu.vector_store %arg6[%c0_24, %c0_25], %32 {strides = array<i32>} : memref<16x1xf32, #tpu.memory_space<vmem>>, vector<16x1xf32>,
    } else {
    }
    return
  }
  func.func @transform_0(%arg0: i32, %arg1: i32) -> (i32, i32) {
    %c0_i32 = arith.constant 0 : i32
    %c0_i32_0 = arith.constant 0 : i32
    return %arg0, %c0_i32 : i32, i32
  }
  func.func @transform_1(%arg0: i32, %arg1: i32) -> (i32, i32) {
    %c0_i32 = arith.constant 0 : i32
    %c0_i32_0 = arith.constant 0 : i32
    return %c0_i32, %arg1 : i32, i32
  }
  func.func @transform_2(%arg0: i32, %arg1: i32) -> (i32, i32) {
    %c0_i32 = arith.constant 0 : i32
    %c0_i32_0 = arith.constant 0 : i32
    return %c0_i32, %arg1 : i32, i32
  }
  func.func @transform_3(%arg0: i32, %arg1: i32) -> (i32, i32) {
    %c0_i32 = arith.constant 0 : i32
    return %arg0, %arg1 : i32, i32
  }
  func.func @transform_4(%arg0: i32, %arg1: i32) -> (i32, i32) {
    %c0_i32 = arith.constant 0 : i32
    %c0_i32_0 = arith.constant 0 : i32
    return %arg0, %c0_i32 : i32, i32
  }
}

</mosaic_0001>

<llo_original>
// kernel: tpu_custom_call.1
$region0: #{tpu_custom_call.1}
  #allocation0 [shape = 'u32[]', space=smem, size = 0x4, offset = 0x4, fixed_abs, tag = 'smem constant byte address 0x4 - core index']
  #allocation1 [shape = 'u32[144,128]{1,0:T(1,128)}', space=vmem, size = 0x12000, scoped, tag = 'internal scratch']
  #allocation2 [shape = 'f32[16,1]{1,0:T(8,128)}', space=vmem, size = 0x2000, scoped, tag = 'scratch operand']
  #allocation3 [shape = 'f32[16,1]{1,0:T(8,128)}', space=vmem, size = 0x2000, scoped, tag = 'scratch operand']
  %s0 = inlined_call_operand.hbm [shape: bf16[16,32], index: 0, kind: input, shape index: {}]
  %s1 = inlined_call_operand.hbm [shape: bf16[32,128], index: 1, kind: input, shape index: {}]
  %s2 = inlined_call_operand.hbm [shape: f32[1,128], index: 2, kind: input, shape index: {}]
  %s3 = inlined_call_operand.hbm [shape: f32[16,128], index: 3, kind: output, shape index: {0}]
  %s4 = inlined_call_operand.hbm [shape: f32[16,1], index: 4, kind: output, shape index: {1}]
  %5 = xla_tuple %s3, %s4
  %s6 = sld [smem:[#allocation0]]
  $region50: #{tpu_custom_call.1} parent=0
    _
  %s8 = ssub.s32 1, %s6
  %s9 = scalar_select 0, %s8, %s6
  $region1: #{tpu_custom_call.1} parent=0
    #allocation4 [shape = 'u8[4096]{0}', space=vmem, size = 0x1000, scoped, tag = 'input window, operand 0, single buffered']
    #allocation5 [shape = 's32[1]{0}', space=sflag, size = 0x4, scoped, tag = 'scoped memory for tpu_custom_call.1']
    #allocation6 [shape = 's32[1]{0}', space=sflag, size = 0x4, scoped, tag = 'scoped memory for tpu_custom_call.1']
    #allocation7 [shape = 'u8[8192]{0}', space=vmem, size = 0x2000, scoped, tag = 'input window, operand 1, single buffered']
    #allocation8 [shape = 's32[1]{0}', space=sflag, size = 0x4, scoped, tag = 'scoped memory for tpu_custom_call.1']
    #allocation9 [shape = 'u8[512]{0}', space=vmem, size = 0x400, scoped, tag = 'input window, operand 2, single buffered']
    #allocation10 [shape = 'u8[8192]{0}', space=vmem, size = 0x2000, scoped, tag = 'output window, operand 0, single buffered']
    #allocation11 [shape = 'u8[8192]{0}', space=vmem, size = 0x2000, scoped, tag = 'output window, operand 1, single buffered']
    #allocation12 [shape = 's32[1]{0}', space=sflag, size = 0x4, scoped, tag = 'scoped memory for tpu_custom_call.1']
    %10 = vsyncpa [#allocation5], 0
    %11 = vsyncpa [#allocation8], 0
    %12 = vsyncpa [#allocation6], 0
    %13 = vsyncpa [#allocation12], 0
    // Predicated region
    $region2: #{tpu_custom_call.1} parent=1 // pred_check
      _
    $region3: #{tpu_custom_call.1} parent=1 // pred_check_branch
      %15 = sbr.rel (0) target = $region5
    $region4: #{tpu_custom_call.1} parent=1 // pred_region
      %s17 = ssub.s32 128, 128
      %18 = vsyncadd [#allocation5], %s17
      %s19 = sshll.u32 [#allocation4], 4
      %s20 = int_to_ptr.vmem [resolvable:$true] %s19
      %25 = dma.hbm_to_vmem [thread:$0]  %s0, 128, %s20, [#allocation5], 64, 64, 4
    $region5: #{tpu_custom_call.1} parent=1 // pred_fallthru
      _
    // Predicated region
    $region6: #{tpu_custom_call.1} parent=1 // pred_check
      _
    $region7: #{tpu_custom_call.1} parent=1 // pred_check_branch
      %27 = sbr.rel (0) target = $region9
    $region8: #{tpu_custom_call.1} parent=1 // pred_region
      %s29 = ssub.s32 256, 256
      %30 = vsyncadd [#allocation8], %s29
      %s31 = sshll.u32 [#allocation7], 4
      %s32 = int_to_ptr.vmem [resolvable:$true] %s31
      %37 = dma.hbm_to_vmem [thread:$0]  %s1, 256, %s32, [#allocation8], 64, 64, 4
    $region9: #{tpu_custom_call.1} parent=1 // pred_fallthru
      _
    // Predicated region
    $region10: #{tpu_custom_call.1} parent=1 // pred_check
      _
    $region11: #{tpu_custom_call.1} parent=1 // pred_check_branch
      %39 = sbr.rel (0) target = $region13
    $region12: #{tpu_custom_call.1} parent=1 // pred_region
      %s41 = ssub.s32 16, 16
      %42 = vsyncadd [#allocation8], %s41
      %s44 = sshll.u32 [#allocation9], 4
      %s45 = int_to_ptr.vmem [resolvable:$true] %s44
      %47 = dma.hbm_to_vmem [thread:$0]  %s2, 16, %s45, [#allocation8]
    $region13: #{tpu_custom_call.1} parent=1 // pred_fallthru
      _
    // Predicated region
    $region14: #{tpu_custom_call.1} parent=1 // pred_check
      _
    $region15: #{tpu_custom_call.1} parent=1 // pred_check_branch
      %49 = sbr.rel (0) target = $region17
    $region16: #{tpu_custom_call.1} parent=1 // pred_region
      %50 = dma.done [#allocation5], 128
    $region17: #{tpu_custom_call.1} parent=1 // pred_fallthru
      _
    // Predicated region
    $region18: #{tpu_custom_call.1} parent=1 // pred_check
      _
    $region19: #{tpu_custom_call.1} parent=1 // pred_check_branch
      %52 = sbr.rel (0) target = $region21
    $region20: #{tpu_custom_call.1} parent=1 // pred_region
      %53 = dma.done [#allocation8], 256
    $region21: #{tpu_custom_call.1} parent=1 // pred_fallthru
      _
    // Predicated region
    $region22: #{tpu_custom_call.1} parent=1 // pred_check
      _
    $region23: #{tpu_custom_call.1} parent=1 // pred_check_branch
      %55 = sbr.rel (0) target = $region25
    $region24: #{tpu_custom_call.1} parent=1 // pred_region
      %56 = dma.done [#allocation8], 16
    $region25: #{tpu_custom_call.1} parent=1 // pred_fallthru
      _
    %p58 = scmp.eq.s32.totalorder 0, 0
    // Predicated region
    $region26: #{tpu_custom_call.1} parent=1 // pred_check
      %p59 = pneg %p58
    $region27: #{tpu_custom_call.1} parent=1 // pred_check_branch
      %61 = sbr.rel (%p59) target = $region29
    $region28: #{tpu_custom_call.1} parent=1 // pred_region
      %vm62 = vcmask 7168
      %63 = vst.msk [vmem:[#allocation2] sm:$0xff] %vm62, -inf
      %64 = vst.msk [vmem:[#allocation2 + $0x8] sm:$0xff] %vm62, -inf
      %65 = vst.msk [vmem:[#allocation3] sm:$0xff] %vm62, 0.0
      %66 = vst.msk [vmem:[#allocation3 + $0x8] sm:$0xff] %vm62, 0.0
    $region29: #{tpu_custom_call.1} parent=1 // pred_fallthru
      _
    %v67 = vld [vmem:[#allocation4] sm:$0xf]
    %v68 = vld [vmem:[#allocation4 + $0x4] sm:$0xf]
    %v69 = vld [vmem:[#allocation7] sm:$0xf]
    %v70 = vld [vmem:[#allocation7 + $0x4] sm:$0xf]
    %v71 = vld [vmem:[#allocation7 + $0x8] sm:$0xf]
    %v72 = vld [vmem:[#allocation7 + $0xc] sm:$0xf]
    %v73 = vld [vmem:[#allocation9] sm:$0x1]
    %v75 = vlaneseq
    %v76 = vshrl.u32 %v75, 7
    %v77 = vsub.s32 0, %v76
    %v78 = vrot.slane %v73, %v77
    %v82 = vunpack.c.l.b16 %v67
    %v83 = vunpack.c.l.b16 %v68
    %v84 = vpack.c.b16 %v83, %v82
    %v89 = vunpack.c.l.b16 %v69
    %v90 = vunpack.c.l.b16 %v70
    %v91 = vunpack.c.l.b16 %v71
    %v92 = vunpack.c.l.b16 %v72
    %v93 = vpack.c.b16 %v90, %v89
    %v94 = vpack.c.b16 %v92, %v91
    %vm97 = vcmask 261120
    %v99 = vsel %vm97, %v84, 0
    %101 = vmatprep.subr.bf16.mxu0 0
    %102 = vmatpush1.bf16.msra.mxu0 %v93
    %103 = vmatprep.subr.bf16.mxu0 0
    %104 = vmatpush1.bf16.msra.mxu0 %v94
    %105 = vmatprep.subr.bf16.mxu0 0
    %106 = vmatpush1.bf16.msra.mxu0 0
    %107 = vmatprep.subr.bf16.mxu0 0
    %108 = vmatpush1.bf16.msra.mxu0 0
    %109 = vmatprep.subr.bf16.mxu0 0
    %110 = vmatpush1.bf16.msra.mxu0 0
    %111 = vmatprep.subr.bf16.mxu0 0
    %112 = vmatpush1.bf16.msra.mxu0 0
    %113 = vmatprep.subr.bf16.mxu0 0
    %114 = vmatpush1.bf16.msra.mxu0 0
    %115 = vmatprep.subr.bf16.mxu0 0
    %116 = vmatpush1.bf16.msra.mxu0 0
    %117 = vmatprep.subr.bf16.mxu0 0
    %118 = vmatpush1.bf16.msra.mxu0 0
    %119 = vmatprep.subr.bf16.mxu0 0
    %120 = vmatpush1.bf16.msra.mxu0 0
    %121 = vmatprep.subr.bf16.mxu0 0
    %122 = vmatpush1.bf16.msra.mxu0 0
    %123 = vmatprep.subr.bf16.mxu0 0
    %124 = vmatpush1.bf16.msra.mxu0 0
    %125 = vmatprep.subr.bf16.mxu0 0
    %126 = vmatpush1.bf16.msra.mxu0 0
    %127 = vmatprep.subr.bf16.mxu0 0
    %128 = vmatpush1.bf16.msra.mxu0 0
    %129 = vmatprep.subr.bf16.mxu0 0
    %130 = vmatpush1.bf16.msra.mxu0 0
    %131 = vmatprep.subr.bf16.mxu0 0
    %132 = vmatpush1.bf16.msra.mxu0 0
    %133 = vmatprep.mubr.bf16.mxu0 0
    %134 = vmatmul.mubr.bf16.gmra.mrb[0].mxu0 %v99
    %v135 = vpop.f32.mrb[0].mxu0
    %v136 = vadd.f32 %v78, %v135
    %v137 = vpop.f32.mrb[0].mxu0
    %v138 = vpop.f32.mrb[0].mxu0
    %v139 = vadd.f32 %v78, %v138
    %v140 = vpop.f32.mrb[0].mxu0
    %141 = vdwg.mxu0
    %142 = vst [vmem:[#allocation10] sm:$0xff] %v136
    %143 = vst [vmem:[#allocation10 + $0x8] sm:$0xff] %v139
    %v144 = vld [vmem:[#allocation2] sm:$0xff]
    %v145 = vld [vmem:[#allocation2 + $0x8] sm:$0xff]
    %146 = vmax.xlane.f32.xlu0 %v136
    %v147 = vpop.xlane.xlu0 %146
    %148 = vmax.xlane.f32.xlu0 %v139
    %v149 = vpop.xlane.xlu0 %148
    %v150 = vmax.f32 %v144, %v147
    %v151 = vmax.f32 %v145, %v149
    %v152 = vld [vmem:[#allocation3] sm:$0xff]
    %v153 = vld [vmem:[#allocation3 + $0x8] sm:$0xff]
    %v154 = vsub.f32 %v144, %v150
    %v155 = vsub.f32 %v145, %v151
    %v156 = vmul.f32 %v154, 1.442695
    %v157 = vpow.pop %v156
    %v158 = vmul.f32 %v155, 1.442695
    %v159 = vpow.pop %v158
    %v160 = vmul.f32 %v152, %v157
    %v161 = vmul.f32 %v153, %v159
    %163 = vset.pattern.permute.xlu0 0
    %164 = vperm.xlu0 %163, %v150
    %v165 = vpop.permute.xlu0 %164
    %168 = vset.pattern.permute.xlu0 0
    %169 = vperm.xlu0 %168, %v151
    %v170 = vpop.permute.xlu0 %169
    %v172 = vsub.f32 %v136, %v165
    %v173 = vsub.f32 %v139, %v170
    %v174 = vmul.f32 %v172, 1.442695
    %v175 = vpow.pop %v174
    %v176 = vmul.f32 %v173, 1.442695
    %v177 = vpow.pop %v176
    %178 = vadd.xlane.f32.xlu0 %v175
    %v179 = vpop.xlane.xlu0 %178
    %180 = vadd.xlane.f32.xlu0 %v177
    %v181 = vpop.xlane.xlu0 %180
    %v182 = vadd.f32 %v160, %v179
    %v183 = vadd.f32 %v161, %v181
    %vm184 = vcmask 7168
    %185 = vst.msk [vmem:[#allocation3] sm:$0xff] %vm184, %v182
    %186 = vst.msk [vmem:[#allocation3 + $0x8] sm:$0xff] %vm184, %v183
    %187 = vst.msk [vmem:[#allocation2] sm:$0xff] %vm184, %v150
    %188 = vst.msk [vmem:[#allocation2 + $0x8] sm:$0xff] %vm184, %v151
    // Predicated region
    $region30: #{tpu_custom_call.1} parent=1 // pred_check
      %p189 = pneg %p58
    $region31: #{tpu_custom_call.1} parent=1 // pred_check_branch
      %191 = sbr.rel (%p189) target = $region33
    $region32: #{tpu_custom_call.1} parent=1 // pred_region
      %v192 = vld [vmem:[#allocation2] sm:$0xff]
      %v193 = vld [vmem:[#allocation2 + $0x8] sm:$0xff]
      %v194 = vld [vmem:[#allocation3] sm:$0xff]
      %v195 = vld [vmem:[#allocation3 + $0x8] sm:$0xff]
      %v196 = vlog2.pop %v194
      %v197 = vmul.f32 %v196, 0.6931472
      %v198 = vlog2.pop %v195
      %v199 = vmul.f32 %v198, 0.6931472
      %v200 = vadd.f32 %v192, %v197
      %v201 = vadd.f32 %v193, %v199
      %202 = vst.msk [vmem:[#allocation11] sm:$0xff] %vm184, %v200
      %203 = vst.msk [vmem:[#allocation11 + $0x8] sm:$0xff] %vm184, %v201
    $region33: #{tpu_custom_call.1} parent=1 // pred_fallthru
      _
    // Predicated region
    $region34: #{tpu_custom_call.1} parent=1 // pred_check
      _
    $region35: #{tpu_custom_call.1} parent=1 // pred_check_branch
      %205 = sbr.rel (0) target = $region37
    $region36: #{tpu_custom_call.1} parent=1 // pred_region
      %s207 = ssub.s32 256, 256
      %208 = vsyncadd [#allocation6], %s207
      %s209 = sshll.u32 [#allocation10], 4
      %s210 = int_to_ptr.vmem [resolvable:$true] %s209
      %215 = dma.vmem_to_hbm [thread:$0]  %s210, 256, %s3, [#allocation6], 128, 128, 8
    $region37: #{tpu_custom_call.1} parent=1 // pred_fallthru
      _
    // Predicated region
    $region38: #{tpu_custom_call.1} parent=1 // pred_check
      _
    $region39: #{tpu_custom_call.1} parent=1 // pred_check_branch
      %217 = sbr.rel (0) target = $region41
    $region40: #{tpu_custom_call.1} parent=1 // pred_region
      %s219 = ssub.s32 256, 256
      %220 = vsyncadd [#allocation12], %s219
      %s221 = sshll.u32 [#allocation11], 4
      %s222 = int_to_ptr.vmem [resolvable:$true] %s221
      %227 = dma.vmem_to_hbm [thread:$0]  %s222, 256, %s4, [#allocation12], 128, 128, 8
    $region41: #{tpu_custom_call.1} parent=1 // pred_fallthru
      _
    // Predicated region
    $region42: #{tpu_custom_call.1} parent=1 // pred_check
      _
    $region43: #{tpu_custom_call.1} parent=1 // pred_check_branch
      %229 = sbr.rel (0) target = $region45
    $region44: #{tpu_custom_call.1} parent=1 // pred_region
      %230 = dma.done [#allocation6], 256
    $region45: #{tpu_custom_call.1} parent=1 // pred_fallthru
      _
    // Predicated region
    $region46: #{tpu_custom_call.1} parent=1 // pred_check
      _
    $region47: #{tpu_custom_call.1} parent=1 // pred_check_branch
      %232 = sbr.rel (0) target = $region49
    $region48: #{tpu_custom_call.1} parent=1 // pred_region
      %233 = dma.done [#allocation12], 256
    $region49: #{tpu_custom_call.1} parent=1 // pred_fallthru
      _
    %234 = vsyncpa [#allocation5], 1
    %235 = vsyncpa [#allocation8], 1
    %236 = vsyncpa [#allocation6], 1
    %237 = vsyncpa [#allocation12], 1

</llo_original>
